<compile_context>
chip_gen: v7x
topology: tpu7x:2x2x1
jax: 0.10.0
libtpu: 0.0.40
codegen_flags: <defaults>
</compile_context>

<pallas_src>
import jax
import jax.numpy as jnp
from jax.experimental import pallas as pl
from jax.experimental.pallas import tpu as pltpu

_LANE = 128


def _round_up(x, m):
    return (x + m - 1) // m * m


def _edge_encoder_kernel(xt_ref, w1t_ref, b1_ref, w2t_ref, b2_ref, yt_ref):
    # xt: (9, TILE_N) bf16 ; weights bf16 ; biases f32 columns ; output f32.
    h = jnp.dot(w1t_ref[...], xt_ref[...],
                preferred_element_type=jnp.float32)              # (D0, TILE_N)
    h = jnp.maximum(h + b1_ref[...], 0.0)                        # bias + ReLU (f32)
    y = jnp.dot(w2t_ref[...], h.astype(jnp.bfloat16),
                preferred_element_type=jnp.float32)              # (2*D1, TILE_N)
    yt_ref[...] = jax.nn.sigmoid(y + b2_ref[...]).astype(yt_ref.dtype)


def edge_encoder_forward(edge, w1, b1, w2, b2, layers_dim, *,
                         tile_n=4096, min_pallas_rows=1024):
    """edge: (N, 9); returns two arrays of shape (N, layers_dim[1], 1, 1)."""
    d0, d1 = layers_dim
    edge = edge.astype(jnp.float32)
    n = edge.shape[0]

    # torch's view(-1, D1, 2): even output columns -> channel 0, odd -> 1.
    # Fold the de-interleave into the tiny second-layer params so the fused
    # kernel output is [channel-0 rows ; channel-1 rows] (contiguous split).
    w2_ab = jnp.concatenate([w2[:, 0::2], w2[:, 1::2]], axis=1)   # (D0, 2*D1)
    b2_ab = jnp.concatenate([b2[0::2], b2[1::2]], axis=0)         # (2*D1,)

    if n < min_pallas_rows:
        # Tiny N: pallas dispatch / padding / slicing overhead dominates over
        # ~1 us of work; plain XLA fuses this small MLP fine.
        h = jnp.maximum(edge @ w1 + b1, 0.0)
        y = jax.nn.sigmoid(h @ w2_ab + b2_ab)                     # (N, 2*D1)
        return (y[:, :d1].reshape(n, d1, 1, 1),
                y[:, d1:].reshape(n, d1, 1, 1))

    # --- Pallas path: transposed ("N on the lane axis") formulation. -------
    # Keep >= 2 grid steps whenever possible so both v7x TCs get work.
    tile_cap = _round_up(pl.cdiv(_round_up(n, _LANE), 2), _LANE)
    tile_n = max(_LANE, min(tile_n, tile_cap))
    n_pad = _round_up(n, tile_n)
    grid = (n_pad // tile_n,)

    xt = edge.astype(jnp.bfloat16).T                              # (9, N) bf16
    if n_pad != n:
        xt = jnp.pad(xt, ((0, 0), (0, n_pad - n)))                # garbage cols, dropped

    w1t = w1.T.astype(jnp.bfloat16)                               # (D0, 9)
    b1c = b1.reshape(d0, 1).astype(jnp.float32)                   # (D0, 1)
    w2t = w2_ab.T.astype(jnp.bfloat16)                            # (2*D1, D0)
    b2c = b2_ab.reshape(2 * d1, 1).astype(jnp.float32)            # (2*D1, 1)

    flops = 2 * n_pad * (9 * d0 + d0 * 2 * d1)
    bytes_accessed = (
        _round_up(9, 16) * n_pad * 2                      # bf16 input (9->16 sublane pad)
        + (w1t.size + w2t.size) * 2
        + (b1c.size + b2c.size) * 4
        + 2 * d1 * n_pad * 4)                             # f32 output, lane-dense
    cost = pl.CostEstimate(flops=flops,
                           transcendentals=n_pad * 2 * d1,
                           bytes_accessed=bytes_accessed)

    def const2d(shape):
        # Constant index_map -> fetched once, stays VMEM-resident.
        return pl.BlockSpec(shape, lambda i: (0, 0))

    yt = pl.pallas_call(
        _edge_encoder_kernel,
        grid=grid,
        out_shape=jax.ShapeDtypeStruct((2 * d1, n_pad), jnp.float32),
        in_specs=[
            pl.BlockSpec((9, tile_n), lambda i: (0, i)),   # streamed edge columns
            const2d((d0, 9)),                              # W1^T
            const2d((d0, 1)),                              # b1
            const2d((2 * d1, d0)),                         # fused W2^T
            const2d((2 * d1, 1)),                          # fused b2
        ],
        out_specs=pl.BlockSpec((2 * d1, tile_n), lambda i: (0, i)),
        compiler_params=pltpu.CompilerParams(
            dimension_semantics=("parallel",),
            vmem_limit_bytes=32 * 1024 * 1024),
        cost_estimate=cost,
    )(xt, w1t, b1c, w2t, b2c)

    # Wrapper-side layout plumbing back to torch's (N, D1, 1, 1) outputs.
    # (Consumers that accept the transposed (D1, N) layout should skip this.)
    out_a = yt[:d1, :n].T.reshape(n, d1, 1, 1)
    out_b = yt[d1:, :n].T.reshape(n, d1, 1, 1)
    return out_a, out_b


if __name__ == "__main__":
    layers_dim = (32, 16)   # (D0, D1)
    N = 300                 # deliberately not a multiple of 128

    key = jax.random.PRNGKey(0)
    k_x, k_w1, k_b1, k_w2, k_b2 = jax.random.split(key, 5)

    # Deterministic synthetic parameters (nn.Linear shapes, stored (in, out)).
    w1 = jax.random.normal(k_w1, (9, layers_dim[0]), jnp.float32) * 0.1
    b1 = jax.random.normal(k_b1, (layers_dim[0],), jnp.float32) * 0.1
    w2 = jax.random.normal(k_w2, (layers_dim[0], layers_dim[1] * 2), jnp.float32) * 0.1
    b2 = jax.random.normal(k_b2, (layers_dim[1] * 2,), jnp.float32) * 0.1

    edge = jax.random.normal(k_x, (N, 9), jnp.float32)

    # Force the Pallas path so the kernel itself is exercised (grid = (2,)).
    out_a, out_b = edge_encoder_forward(edge, w1, b1, w2, b2, layers_dim,
                                        min_pallas_rows=0)
    jax.block_until_ready((out_a, out_b))

    # Reference in full-precision JAX (same math as the PyTorch module).
    h_ref = jnp.maximum(edge @ w1 + b1, 0.0)
    y_ref = jax.nn.sigmoid(h_ref @ w2 + b2).reshape(N, layers_dim[1], 2)
    ref_a = y_ref[:, :, 0][:, :, None, None]
    ref_b = y_ref[:, :, 1][:, :, None, None]

    assert out_a.shape == (N, layers_dim[1], 1, 1)
    assert out_b.shape == (N, layers_dim[1], 1, 1)
    # bf16 streaming => slightly looser tolerance than pure f32.
    assert jnp.allclose(out_a, ref_a, atol=2e-2), float(jnp.max(jnp.abs(out_a - ref_a)))
    assert jnp.allclose(out_b, ref_b, atol=2e-2), float(jnp.max(jnp.abs(out_b - ref_b)))

    # Small-N XLA fallback path (default threshold) matches the reference too.
    fb_a, fb_b = edge_encoder_forward(edge, w1, b1, w2, b2, layers_dim)
    jax.block_until_ready((fb_a, fb_b))
    assert jnp.allclose(fb_a, ref_a, atol=1e-5)
    assert jnp.allclose(fb_b, ref_b, atol=1e-5)

    print("KERNEL_OK")
</pallas_src>

<mosaic_0001>
module attributes {stable_mosaic.version = 11 : i64} {
  func.func @_edge_encoder_kernel(%arg0: i32, %arg1: memref<9x256xbf16, #tpu.memory_space<vmem>>, %arg2: memref<32x9xbf16, #tpu.memory_space<vmem>>, %arg3: memref<32x1xf32, #tpu.memory_space<vmem>>, %arg4: memref<32x32xbf16, #tpu.memory_space<vmem>>, %arg5: memref<32x1xf32, #tpu.memory_space<vmem>>, %arg6: memref<32x256xf32, #tpu.memory_space<vmem>>) attributes {dimension_semantics = [#tpu.dimension_semantics<parallel>], iteration_bounds = array<i64: 2>, scalar_prefetch = 0 : i64, scratch_operands = 0 : i64, tpu.core_type = #tpu.core_type<tc>, window_params = [{transform_indices = @transform_0, window_bounds = array<i64: 9, 256>}, {pipeline_mode = #tpu.pipeline_mode<synchronous>, transform_indices = @transform_1, window_bounds = array<i64: 32, 9>}, {pipeline_mode = #tpu.pipeline_mode<synchronous>, transform_indices = @transform_2, window_bounds = array<i64: 32, 1>}, {pipeline_mode = #tpu.pipeline_mode<synchronous>, transform_indices = @transform_3, window_bounds = array<i64: 32, 32>}, {pipeline_mode = #tpu.pipeline_mode<synchronous>, transform_indices = @transform_4, window_bounds = array<i64: 32, 1>}, {transform_indices = @transform_5, window_bounds = array<i64: 32, 256>}]} {
    %c0 = arith.constant 0 : index
    %c0_0 = arith.constant 0 : index
    %0 = vector.load %arg2[%c0, %c0_0] : memref<32x9xbf16, #tpu.memory_space<vmem>>, vector<32x9xbf16>
    %c0_1 = arith.constant 0 : index
    %c0_2 = arith.constant 0 : index
    %1 = vector.load %arg1[%c0_1, %c0_2] : memref<9x256xbf16, #tpu.memory_space<vmem>>, vector<9x256xbf16>
    %cst = arith.constant dense<0.000000e+00> : vector<32x256xf32>
    %2 = tpu.matmul %0, %1, %cst {dimension_numbers = #tpu.dot_dimension_numbers<[1], [0], [0], [1], [0, 0, 1, 1], [], []>} : vector<32x9xbf16>, vector<9x256xbf16>, vector<32x256xf32> -> vector<32x256xf32>
    %c0_3 = arith.constant 0 : index
    %c0_4 = arith.constant 0 : index
    %3 = vector.load %arg3[%c0_3, %c0_4] : memref<32x1xf32, #tpu.memory_space<vmem>>, vector<32x1xf32>
    %4 = vector.broadcast %3 : vector<32x1xf32> to vector<32x256xf32>
    %5 = arith.addf %2, %4 : vector<32x256xf32>
    %cst_5 = arith.constant 0.000000e+00 : f32
    %6 = vector.broadcast %cst_5 : f32 to vector<32x256xf32>
    %7 = arith.maximumf %5, %6 : vector<32x256xf32>
    %c0_6 = arith.constant 0 : index
    %c0_7 = arith.constant 0 : index
    %8 = vector.load %arg4[%c0_6, %c0_7] : memref<32x32xbf16, #tpu.memory_space<vmem>>, vector<32x32xbf16>
    %9 = arith.truncf %7 : vector<32x256xf32> to vector<32x256xbf16>
    %cst_8 = arith.constant dense<0.000000e+00> : vector<32x256xf32>
    %10 = tpu.matmul %8, %9, %cst_8 {dimension_numbers = #tpu.dot_dimension_numbers<[1], [0], [0], [1], [0, 0, 1, 1], [], []>} : vector<32x32xbf16>, vector<32x256xbf16>, vector<32x256xf32> -> vector<32x256xf32>
    %c0_9 = arith.constant 0 : index
    %c0_10 = arith.constant 0 : index
    %11 = vector.load %arg5[%c0_9, %c0_10] : memref<32x1xf32, #tpu.memory_space<vmem>>, vector<32x1xf32>
    %12 = vector.broadcast %11 : vector<32x1xf32> to vector<32x256xf32>
    %13 = arith.addf %10, %12 : vector<32x256xf32>
    %14 = arith.negf %13 : vector<32x256xf32>
    %15 = math.exp %14 : vector<32x256xf32>
    %cst_11 = arith.constant 1.000000e+00 : f32
    %16 = vector.broadcast %cst_11 : f32 to vector<32x256xf32>
    %17 = arith.addf %16, %15 : vector<32x256xf32>
    %18 = arith.divf %16, %17 : vector<32x256xf32>
    %c0_12 = arith.constant 0 : index
    %c0_13 = arith.constant 0 : index
    %19 = vector.load %arg6[%c0_12, %c0_13] : memref<32x256xf32, #tpu.memory_space<vmem>>, vector<32x256xf32>
    tpu.vector_store %arg6[%c0_12, %c0_13], %18 {strides = array<i32>} : memref<32x256xf32, #tpu.memory_space<vmem>>, vector<32x256xf32>,
    return
  }
  func.func @transform_0(%arg0: i32) -> (i32, i32) {
    %c0_i32 = arith.constant 0 : i32
    %c0_i32_0 = arith.constant 0 : i32
    return %c0_i32, %arg0 : i32, i32
  }
  func.func @transform_1(%arg0: i32) -> (i32, i32) {
    %c0_i32 = arith.constant 0 : i32
    %c0_i32_0 = arith.constant 0 : i32
    %c0_i32_1 = arith.constant 0 : i32
    return %c0_i32, %c0_i32_0 : i32, i32
  }
  func.func @transform_2(%arg0: i32) -> (i32, i32) {
    %c0_i32 = arith.constant 0 : i32
    %c0_i32_0 = arith.constant 0 : i32
    %c0_i32_1 = arith.constant 0 : i32
    return %c0_i32, %c0_i32_0 : i32, i32
  }
  func.func @transform_3(%arg0: i32) -> (i32, i32) {
    %c0_i32 = arith.constant 0 : i32
    %c0_i32_0 = arith.constant 0 : i32
    %c0_i32_1 = arith.constant 0 : i32
    return %c0_i32, %c0_i32_0 : i32, i32
  }
  func.func @transform_4(%arg0: i32) -> (i32, i32) {
    %c0_i32 = arith.constant 0 : i32
    %c0_i32_0 = arith.constant 0 : i32
    %c0_i32_1 = arith.constant 0 : i32
    return %c0_i32, %c0_i32_0 : i32, i32
  }
  func.func @transform_5(%arg0: i32) -> (i32, i32) {
    %c0_i32 = arith.constant 0 : i32
    %c0_i32_0 = arith.constant 0 : i32
    return %c0_i32, %arg0 : i32, i32
  }
}

</mosaic_0001>

<llo_original>
// kernel: tpu_custom_call.1
$region0: #{tpu_custom_call.1}
  #allocation0 [shape = 'u32[]', space=smem, size = 0x4, offset = 0x4, fixed_abs, tag = 'smem constant byte address 0x4 - core index']
  #allocation1 [shape = 'u32[144,128]{1,0:T(1,128)}', space=vmem, size = 0x12000, scoped, tag = 'internal scratch']
  %s0 = inlined_call_operand.vmem [shape: bf16[9,512], index: 0, kind: input, shape index: {}]
  %s1 = inlined_call_operand.vmem [shape: bf16[32,9], index: 1, kind: input, shape index: {}]
  %s2 = inlined_call_operand.vmem [shape: f32[32,1], index: 2, kind: input, shape index: {}]
  %s3 = inlined_call_operand.vmem [shape: bf16[32,32], index: 3, kind: input, shape index: {}]
  %s4 = inlined_call_operand.vmem [shape: f32[32,1], index: 4, kind: input, shape index: {}]
  %s5 = inlined_call_operand.hbm [shape: f32[32,512], index: 5, kind: output, shape index: {}]
  %s6 = sld [smem:[#allocation0]]
  $region91: #{tpu_custom_call.1} parent=0
    _
  %s8 = ssub.s32 1, %s6
  %s9 = scalar_select 0, %s8, %s6
  $region1: #{tpu_custom_call.1} parent=0
    #allocation2 [shape = 'u8[16384]{0}', space=vmem, size = 0x4000, scoped, tag = 'input window, operand 0']
    #allocation3 [shape = 'u8[65536]{0}', space=vmem, size = 0x10000, scoped, tag = 'output window, operand 0']
    #allocation4 [shape = 's32[2]{0}', space=sflag, size = 0x8, scoped, tag = 'scoped memory for tpu_custom_call.1']
    %10 = vsyncpa [#allocation4], 0
    %s11 = scalar_lea.sflag [#allocation4], 1
    %12 = vsyncpa %s11, 0
    loop: start=0, step=1, limit=4
    $region2: #{tpu_custom_call.1} parent=1 // loop_pre_header
      _
    $region3: #{tpu_custom_call.1} parent=1 // loop_header
      %s14 = sphi 0, %s18
      %p15 = scmp.ge.s32.totalorder %s14, 4
      %s24 = sphi 0, %s26
      %s27 = sphi 0, %s24
      %s28 = sphi 0, %s27
      %s44 = sphi 0, %s28
      %s48 = sphi 0, %s48
      %s50 = sphi 0, %s48
      %s51 = sphi 0, %s50
      %s65 = sphi 0, %s51
      %s69 = sphi 0, %s69
      %s71 = sphi 0, %s69
      %s72 = sphi 0, %s71
      %s86 = sphi 0, %s72
      %s90 = sphi 0, %s90
      %s92 = sphi 0, %s90
      %s93 = sphi 0, %s92
      %s107 = sphi 0, %s93
      %s111 = sphi 0, %s111
      %s113 = sphi 0, %s111
      %s114 = sphi 0, %s113
      %s128 = sphi 0, %s114
      %s134 = sphi 0, %s136
      %s137 = sphi 0, %s134
      %s138 = sphi 0, %s137
      %s154 = sphi 0, %s138
    $region4: #{tpu_custom_call.1} parent=1 // loop_header_branch
      %17 = sbr.rel (%p15) target = $region8
    $region5: #{tpu_custom_call.1} parent=1 // loop_body
      %s19 = ssub.s32 %s14, 1
      %s20 = ssub.s32 %s14, 2
      %s21 = sadd.s32 %s14, 1
      %s22 = ssub.s32 %s14, %s21
      %p23 = scmp.eq.s32.totalorder %s22, 0
      %s25 = sadd.s32 %s24, 1
      %s26 = scalar_select %p23, %s24, %s25
      %p29 = pneg %p23
      %p30 = scmp.eq.s32.totalorder %s14, 1
      %p31 = por %p29, %p30
      %p32 = scmp.ne.s32.totalorder %s24, %s27
      %p33 = scmp.eq.s32.totalorder %s14, 0
      %p34 = por %p32, %p33
      %p35 = scmp.ne.s32.totalorder %s24, %s27
      %p36 = scmp.eq.s32.totalorder %s19, 1
      %p37 = por %p35, %p36
      %p38 = scmp.ne.s32.totalorder %s27, %s28
      %p39 = scmp.eq.s32.totalorder %s19, 0
      %p40 = por %p38, %p39
      %p41 = scmp.ne.s32.totalorder %s27, %s28
      %p42 = scmp.eq.s32.totalorder %s20, 1
      %p43 = por %p41, %p42
      %p45 = scmp.ne.s32.totalorder %s28, %s44
      %p46 = scmp.eq.s32.totalorder %s20, 0
      %p47 = por %p45, %p46
      %s49 = sadd.s32 %s48, 1
      %p52 = scmp.eq.s32.totalorder %s14, 1
      %p53 = scmp.ne.s32.totalorder %s48, %s50
      %p54 = scmp.eq.s32.totalorder %s14, 0
      %p55 = por %p53, %p54
      %p56 = scmp.ne.s32.totalorder %s48, %s50
      %p57 = scmp.eq.s32.totalorder %s19, 1
      %p58 = por %p56, %p57
      %p59 = scmp.ne.s32.totalorder %s50, %s51
      %p60 = scmp.eq.s32.totalorder %s19, 0
      %p61 = por %p59, %p60
      %p62 = scmp.ne.s32.totalorder %s50, %s51
      %p63 = scmp.eq.s32.totalorder %s20, 1
      %p64 = por %p62, %p63
      %p66 = scmp.ne.s32.totalorder %s51, %s65
      %p67 = scmp.eq.s32.totalorder %s20, 0
      %p68 = por %p66, %p67
      %s70 = sadd.s32 %s69, 1
      %p73 = scmp.eq.s32.totalorder %s14, 1
      %p74 = scmp.ne.s32.totalorder %s69, %s71
      %p75 = scmp.eq.s32.totalorder %s14, 0
      %p76 = por %p74, %p75
      %p77 = scmp.ne.s32.totalorder %s69, %s71
      %p78 = scmp.eq.s32.totalorder %s19, 1
      %p79 = por %p77, %p78
      %p80 = scmp.ne.s32.totalorder %s71, %s72
      %p81 = scmp.eq.s32.totalorder %s19, 0
      %p82 = por %p80, %p81
      %p83 = scmp.ne.s32.totalorder %s71, %s72
      %p84 = scmp.eq.s32.totalorder %s20, 1
      %p85 = por %p83, %p84
      %p87 = scmp.ne.s32.totalorder %s72, %s86
      %p88 = scmp.eq.s32.totalorder %s20, 0
      %p89 = por %p87, %p88
      %s91 = sadd.s32 %s90, 1
      %p94 = scmp.eq.s32.totalorder %s14, 1
      %p95 = scmp.ne.s32.totalorder %s90, %s92
      %p96 = scmp.eq.s32.totalorder %s14, 0
      %p97 = por %p95, %p96
      %p98 = scmp.ne.s32.totalorder %s90, %s92
      %p99 = scmp.eq.s32.totalorder %s19, 1
      %p100 = por %p98, %p99
      %p101 = scmp.ne.s32.totalorder %s92, %s93
      %p102 = scmp.eq.s32.totalorder %s19, 0
      %p103 = por %p101, %p102
      %p104 = scmp.ne.s32.totalorder %s92, %s93
      %p105 = scmp.eq.s32.totalorder %s20, 1
      %p106 = por %p104, %p105
      %p108 = scmp.ne.s32.totalorder %s93, %s107
      %p109 = scmp.eq.s32.totalorder %s20, 0
      %p110 = por %p108, %p109
      %s112 = sadd.s32 %s111, 1
      %p115 = scmp.eq.s32.totalorder %s14, 1
      %p116 = scmp.ne.s32.totalorder %s111, %s113
      %p117 = scmp.eq.s32.totalorder %s14, 0
      %p118 = por %p116, %p117
      %p119 = scmp.ne.s32.totalorder %s111, %s113
      %p120 = scmp.eq.s32.totalorder %s19, 1
      %p121 = por %p119, %p120
      %p122 = scmp.ne.s32.totalorder %s113, %s114
      %p123 = scmp.eq.s32.totalorder %s19, 0
      %p124 = por %p122, %p123
      %p125 = scmp.ne.s32.totalorder %s113, %s114
      %p126 = scmp.eq.s32.totalorder %s20, 1
      %p127 = por %p125, %p126
      %p129 = scmp.ne.s32.totalorder %s114, %s128
      %p130 = scmp.eq.s32.totalorder %s20, 0
      %p131 = por %p129, %p130
      %s132 = ssub.s32 %s14, %s21
      %p133 = scmp.eq.s32.totalorder %s132, 0
      %s135 = sadd.s32 %s134, 1
      %s136 = scalar_select %p133, %s134, %s135
      %p139 = pneg %p133
      %p140 = scmp.eq.s32.totalorder %s14, 1
      %p141 = por %p139, %p140
      %p142 = scmp.ne.s32.totalorder %s134, %s137
      %p143 = scmp.eq.s32.totalorder %s14, 0
      %p144 = por %p142, %p143
      %p145 = scmp.ne.s32.totalorder %s134, %s137
      %p146 = scmp.eq.s32.totalorder %s19, 1
      %p147 = por %p145, %p146
      %p148 = scmp.ne.s32.totalorder %s137, %s138
      %p149 = scmp.eq.s32.totalorder %s19, 0
      %p150 = por %p148, %p149
      %p151 = scmp.ne.s32.totalorder %s137, %s138
      %p152 = scmp.eq.s32.totalorder %s20, 1
      %p153 = por %p151, %p152
      %p155 = scmp.ne.s32.totalorder %s138, %s154
      %p156 = scmp.eq.s32.totalorder %s20, 0
      %p157 = por %p155, %p156
      %p158 = scmp.le.s32.totalorder 1, %s14
      %p159 = scmp.lt.s32.totalorder %s14, 3
      %p160 = pnand %p158, %p159
      %p161 = pneg %p160
      // Predicated region
      $region9: #{tpu_custom_call.1} parent=5 // pred_check
        _
      $region10: #{tpu_custom_call.1} parent=5 // pred_check_branch
        %163 = sbr.rel (%p160) target = $region12
      $region11: #{tpu_custom_call.1} parent=5 // pred_region
        %s164 = ssub.s32 %s14, 1
        // Predicated region
        $region13: #{tpu_custom_call.1} parent=11 // pred_check
          %p165 = pneg %p61
        $region14: #{tpu_custom_call.1} parent=11 // pred_check_branch
          %167 = sbr.rel (%p165) target = $region16
        $region15: #{tpu_custom_call.1} parent=11 // pred_region
          _
        $region16: #{tpu_custom_call.1} parent=11 // pred_fallthru
          _
        // Predicated region
        $region17: #{tpu_custom_call.1} parent=11 // pred_check
          %p168 = pneg %p82
        $region18: #{tpu_custom_call.1} parent=11 // pred_check_branch
          %170 = sbr.rel (%p168) target = $region20
        $region19: #{tpu_custom_call.1} parent=11 // pred_region
          _
        $region20: #{tpu_custom_call.1} parent=11 // pred_fallthru
          _
        // Predicated region
        $region21: #{tpu_custom_call.1} parent=11 // pred_check
          %p171 = pneg %p103
        $region22: #{tpu_custom_call.1} parent=11 // pred_check_branch
          %173 = sbr.rel (%p171) target = $region24
        $region23: #{tpu_custom_call.1} parent=11 // pred_region
          _
        $region24: #{tpu_custom_call.1} parent=11 // pred_fallthru
          _
        // Predicated region
        $region25: #{tpu_custom_call.1} parent=11 // pred_check
          %p174 = pneg %p124
        $region26: #{tpu_custom_call.1} parent=11 // pred_check_branch
          %176 = sbr.rel (%p174) target = $region28
        $region27: #{tpu_custom_call.1} parent=11 // pred_region
          _
        $region28: #{tpu_custom_call.1} parent=11 // pred_fallthru
          _
      $region12: #{tpu_custom_call.1} parent=5 // pred_fallthru
        _
      %p177 = scmp.lt.s32.totalorder %s14, 2
      // Predicated region
      $region29: #{tpu_custom_call.1} parent=5 // pred_check
        %p178 = pneg %p177
      $region30: #{tpu_custom_call.1} parent=5 // pred_check_branch
        %180 = sbr.rel (%p178) target = $region32
      $region31: #{tpu_custom_call.1} parent=5 // pred_region
        // Predicated region
        $region33: #{tpu_custom_call.1} parent=31 // pred_check
          %p181 = pneg %p34
        $region34: #{tpu_custom_call.1} parent=31 // pred_check_branch
          %183 = sbr.rel (%p181) target = $region36
        $region35: #{tpu_custom_call.1} parent=31 // pred_region
          %s184 = sand.u32 %s24, 1
          %s185 = sand.u32 %s24, 1
          %s186 = smul.addr %s185, 16
          %s187 = scalar_lea.vmem [#allocation2], %s186
          %s188 = smul.u32 2, %s14
          %s189 = smul.addr %s188, 4
          %s190 = scalar_lea.vmem %s0, %s189
          // Predicated region
          $region37: #{tpu_custom_call.1} parent=35 // pred_check
            _
          $region38: #{tpu_custom_call.1} parent=35 // pred_check_branch
            %192 = sbr.rel (0) target = $region40
          $region39: #{tpu_custom_call.1} parent=35 // pred_region
            // Predicated region
            $region41: #{tpu_custom_call.1} parent=39 // pred_check
              _
            $region42: #{tpu_custom_call.1} parent=39 // pred_check_branch
              %194 = sbr.rel (0) target = $region44
            $region43: #{tpu_custom_call.1} parent=39 // pred_region
              // Predicated region
              $region56: #{tpu_custom_call.1} parent=43 // pred_check
                _
              $region57: #{tpu_custom_call.1} parent=43 // pred_check_branch
                %211 = sbr.rel (0) target = $region59
              $region58: #{tpu_custom_call.1} parent=43 // pred_region
                loop: start=0, step=1, limit=1
                $region60: #{tpu_custom_call.1} parent=58 // loop_pre_header
                  _
                $region61: #{tpu_custom_call.1} parent=58 // loop_header
                  %s213 = sphi 0, %s217
                  %p214 = scmp.ge.s32.totalorder %s213, 1
                  %s218 = sphi %s190, %s190
                  %s219 = sphi %s187, %s187
                $region62: #{tpu_custom_call.1} parent=58 // loop_header_branch
                  %216 = sbr.rel (%p214) target = $region66
                $region63: #{tpu_custom_call.1} parent=58 // loop_body
                  %v220 = vld [vmem:[%s218] sm:$0xff]
                  %221 = vst [vmem:[%s219] sm:$0xff] %v220
                  %v222 = vld [vmem:[%s218 + $0x10] sm:$0xff]
                  %223 = vst [vmem:[%s219 + $0x8] sm:$0xff] %v222
                $region64: #{tpu_custom_call.1} parent=58 // loop_footer
                  %s217 = sadd.s32 1, %s213
                $region65: #{tpu_custom_call.1} parent=58 // loop_footer_branch
                  %212 = sbr.rel target = $region61
                $region66: #{tpu_custom_call.1} parent=58 // loop_exit
                  _
              $region59: #{tpu_custom_call.1} parent=43 // pred_fallthru
                _
              // Predicated region
              $region67: #{tpu_custom_call.1} parent=43 // pred_check
                _
              $region68: #{tpu_custom_call.1} parent=43 // pred_check_branch
                %225 = sbr.rel target = $region70
              $region69: #{tpu_custom_call.1} parent=43 // pred_region
                _
              $region70: #{tpu_custom_call.1} parent=43 // pred_fallthru
                _
            $region44: #{tpu_custom_call.1} parent=39 // pred_fallthru
              _
            // Predicated region
            $region45: #{tpu_custom_call.1} parent=39 // pred_check
              _
            $region46: #{tpu_custom_call.1} parent=39 // pred_check_branch
              %196 = sbr.rel target = $region48
            $region47: #{tpu_custom_call.1} parent=39 // pred_region
              loop: start=0, step=1, limit=1
              $region49: #{tpu_custom_call.1} parent=47 // loop_pre_header
                _
              $region50: #{tpu_custom_call.1} parent=47 // loop_header
                %s199 = sphi 0, %s203
                %p200 = scmp.ge.s32.totalorder %s199, 1
                %s204 = sphi %s190, %s190
                %s205 = sphi %s187, %s187
              $region51: #{tpu_custom_call.1} parent=47 // loop_header_branch
                %202 = sbr.rel (%p200) target = $region55
              $region52: #{tpu_custom_call.1} parent=47 // loop_body
                %v206 = vld [vmem:[%s204] sm:$0xff]
                %207 = vst [vmem:[%s205] sm:$0xff] %v206
                %v208 = vld [vmem:[%s204 + $0x10] sm:$0xff]
                %209 = vst [vmem:[%s205 + $0x8] sm:$0xff] %v208
              $region53: #{tpu_custom_call.1} parent=47 // loop_footer
                %s203 = sadd.s32 1, %s199
              $region54: #{tpu_custom_call.1} parent=47 // loop_footer_branch
                %198 = sbr.rel target = $region50
              $region55: #{tpu_custom_call.1} parent=47 // loop_exit
                _
            $region48: #{tpu_custom_call.1} parent=39 // pred_fallthru
              _
          $region40: #{tpu_custom_call.1} parent=35 // pred_fallthru
            _
          %226 = vnop
        $region36: #{tpu_custom_call.1} parent=31 // pred_fallthru
          _
      $region32: #{tpu_custom_call.1} parent=5 // pred_fallthru
        _
      %p227 = scmp.le.s32.totalorder 1, %s14
      %p228 = scmp.lt.s32.totalorder %s14, 3
      %p229 = pnand %p227, %p228
      %p230 = pneg %p229
      // Predicated region
      $region71: #{tpu_custom_call.1} parent=5 // pred_check
        _
      $region72: #{tpu_custom_call.1} parent=5 // pred_check_branch
        %232 = sbr.rel (%p229) target = $region74
      $region73: #{tpu_custom_call.1} parent=5 // pred_region
        %s233 = ssub.s32 %s14, 1
        %s234 = sand.u32 %s27, 1
        %s235 = sand.u32 %s27, 1
        %s236 = smul.addr %s235, 16
        %s237 = scalar_lea.vmem [#allocation2], %s236
        // Predicated region
        $region75: #{tpu_custom_call.1} parent=73 // pred_check
          %p238 = pneg %p40
        $region76: #{tpu_custom_call.1} parent=73 // pred_check_branch
          %240 = sbr.rel (%p238) target = $region78
        $region77: #{tpu_custom_call.1} parent=73 // pred_region
          _
        $region78: #{tpu_custom_call.1} parent=73 // pred_fallthru
          _
        %s241 = sand.u32 %s27, 1
        %s242 = sand.u32 %s27, 1
        %s243 = smul.addr %s242, 16
        %s244 = scalar_lea.vmem [#allocation2], %s243
        %p245 = pneg %p40
        %p246 = pneg %p37
        %p247 = pneg %p61
        %p248 = pneg %p58
        %p249 = pneg %p82
        %p250 = pneg %p79
        %p251 = pneg %p103
        %p252 = pneg %p100
        %p253 = pneg %p124
        %p254 = pneg %p121
        %p255 = pneg %p150
        %p256 = pneg %p147
        %s257 = sand.u32 %s137, 1
        %s258 = scalar_lea.sflag [#allocation4], %s257
        %s259 = sand.u32 %s137, 1
        %s260 = smul.addr %s259, 64
        %s261 = scalar_lea.vmem [#allocation3], %s260
        %s262 = smul.u32 2, %s19
        %s263 = smul.u32 2, %s19
        %v265 = vld [vmem:[%s1] sm:$0xf]
        %v266 = vld [vmem:[%s1 + $0x4] sm:$0xf]
        %v267 = vld [vmem:[%s1 + $0x8] sm:$0xf]
        %v268 = vld [vmem:[%s1 + $0xc] sm:$0xf]
        %v269 = vld [vmem:[%s237] sm:$0xff]
        %v270 = vld [vmem:[%s237 + $0x8] sm:$0x11]
        %v271 = vld [vmem:[%s2] sm:$0xff]
        %v272 = vld [vmem:[%s2 + $0x8] sm:$0xff]
        %v273 = vld [vmem:[%s2 + $0x10] sm:$0xff]
        %v274 = vld [vmem:[%s2 + $0x18] sm:$0xff]
        %276 = vset.pattern.permute.xlu0 0
        %277 = vperm.xlu0 %276, %v271
        %v278 = vpop.permute.xlu0 %277
        %281 = vset.pattern.permute.xlu0 0
        %282 = vperm.xlu0 %281, %v272
        %v283 = vpop.permute.xlu0 %282
        %286 = vset.pattern.permute.xlu0 0
        %287 = vperm.xlu0 %286, %v273
        %v288 = vpop.permute.xlu0 %287
        %291 = vset.pattern.permute.xlu0 0
        %292 = vperm.xlu0 %291, %v274
        %v293 = vpop.permute.xlu0 %292
        %v299 = vunpack.c.l.b16 %v265
        %v300 = vunpack.c.l.b16 %v266
        %v301 = vunpack.c.l.b16 %v267
        %v302 = vunpack.c.l.b16 %v268
        %v303 = vpack.c.b16 %v300, %v299
        %v304 = vpack.c.b16 %v302, %v301
        %v307 = vunpack.c.l.b16 %v269
        %v308 = vunpack.c.h.b16 %v269
        %v309 = vunpack.c.l.b16 %v270
        %v310 = vunpack.c.h.b16 %v270
        %v311 = vpack.c.b16 %v309, %v307
        %v312 = vpack.c.b16 %v310, %v308
        %vm313 = vcmask 72704
        %v315 = vsel %vm313, %v303, 0
        %v318 = vsel %vm313, %v304, 0
        %vm320 = vcmask 1043456
        %vm321 = vcmask 1044480
        %v322 = vsel %vm320, 4294967295, 65535
        %v323 = vsel %vm321, %v322, 0
        %v325 = vand.u32 %v311, %v323
        %v328 = vand.u32 %v312, %v323
        %330 = vmatprep.subr.bf16.mxu0 %v328
        %331 = vmatpush1.bf16.msra.mxu0 %v325
        %332 = vmatprep.subr.bf16.mxu0 0
        %333 = vmatpush1.bf16.msra.mxu0 0
        %334 = vmatprep.subr.bf16.mxu0 0
        %335 = vmatpush1.bf16.msra.mxu0 0
        %336 = vmatprep.subr.bf16.mxu0 0
        %337 = vmatpush1.bf16.msra.mxu0 0
        %338 = vmatprep.subr.bf16.mxu0 0
        %339 = vmatpush1.bf16.msra.mxu0 0
        %340 = vmatprep.subr.bf16.mxu0 0
        %341 = vmatpush1.bf16.msra.mxu0 0
        %342 = vmatprep.subr.bf16.mxu0 0
        %343 = vmatpush1.bf16.msra.mxu0 0
        %344 = vmatprep.subr.bf16.mxu0 0
        %345 = vmatpush1.bf16.msra.mxu0 0
        %346 = vmatprep.subr.bf16.mxu0 0
        %347 = vmatpush1.bf16.msra.mxu0 0
        %348 = vmatprep.subr.bf16.mxu0 0
        %349 = vmatpush1.bf16.msra.mxu0 0
        %350 = vmatprep.subr.bf16.mxu0 0
        %351 = vmatpush1.bf16.msra.mxu0 0
        %352 = vmatprep.subr.bf16.mxu0 0
        %353 = vmatpush1.bf16.msra.mxu0 0
        %354 = vmatprep.subr.bf16.mxu0 0
        %355 = vmatpush1.bf16.msra.mxu0 0
        %356 = vmatprep.subr.bf16.mxu0 0
        %357 = vmatpush1.bf16.msra.mxu0 0
        %358 = vmatprep.subr.bf16.mxu0 0
        %359 = vmatpush1.bf16.msra.mxu0 0
        %360 = vmatprep.subr.bf16.mxu0 0
        %361 = vmatpush1.bf16.msra.mxu0 0
        %362 = vmatprep.mubr.bf16.mxu0 0
        %363 = vmatmul.mubr.bf16.gmra.mrb[0].mxu0 %v315
        %v364 = vpop.f32.mrb[0].mxu0
        %v365 = vadd.f32 %v278, %v364
        %v366 = vpop.f32.mrb[0].mxu0
        %v367 = vadd.f32 %v278, %v366
        %v368 = vpop.f32.mrb[0].mxu0
        %v369 = vadd.f32 %v283, %v368
        %v370 = vpop.f32.mrb[0].mxu0
        %v371 = vadd.f32 %v283, %v370
        %372 = vmatprep.mubr.bf16.mxu0 0
        %373 = vmatmul.mubr.bf16.gmra.mrb[0].mxu0 %v318
        %v374 = vpop.f32.mrb[0].mxu0
        %v375 = vadd.f32 %v288, %v374
        %v376 = vpop.f32.mrb[0].mxu0
        %v377 = vadd.f32 %v288, %v376
        %v378 = vpop.f32.mrb[0].mxu0
        %v379 = vadd.f32 %v293, %v378
        %v380 = vpop.f32.mrb[0].mxu0
        %v381 = vadd.f32 %v293, %v380
        %382 = vdwg.mxu0
        %v383 = vmax.f32 %v365, 0.0
        %v384 = vmax.f32 %v367, 0.0
        %v385 = vmax.f32 %v369, 0.0
        %v386 = vmax.f32 %v371, 0.0
        %v387 = vmax.f32 %v375, 0.0
        %v388 = vmax.f32 %v377, 0.0
        %v389 = vmax.f32 %v379, 0.0
        %v390 = vmax.f32 %v381, 0.0
        %v391 = vld [vmem:[%s3] sm:$0xf]
        %v392 = vld [vmem:[%s3 + $0x4] sm:$0xf]
        %v393 = vld [vmem:[%s3 + $0x8] sm:$0xf]
        %v394 = vld [vmem:[%s3 + $0xc] sm:$0xf]
        %v395 = vpack.c.bf16 %v385, %v383
        %v396 = vpack.c.bf16 %v386, %v384
        %v397 = vpack.c.bf16 %v389, %v387
        %v398 = vpack.c.bf16 %v390, %v388
        %v399 = vld [vmem:[%s4] sm:$0xff]
        %v400 = vld [vmem:[%s4 + $0x8] sm:$0xff]
        %v401 = vld [vmem:[%s4 + $0x10] sm:$0xff]
        %v402 = vld [vmem:[%s4 + $0x18] sm:$0xff]
        %404 = vset.pattern.permute.xlu0 0
        %405 = vperm.xlu0 %404, %v399
        %v406 = vpop.permute.xlu0 %405
        %409 = vset.pattern.permute.xlu0 0
        %410 = vperm.xlu0 %409, %v400
        %v411 = vpop.permute.xlu0 %410
        %414 = vset.pattern.permute.xlu0 0
        %415 = vperm.xlu0 %414, %v401
        %v416 = vpop.permute.xlu0 %415
        %419 = vset.pattern.permute.xlu0 0
        %420 = vperm.xlu0 %419, %v402
        %v421 = vpop.permute.xlu0 %420
        %v427 = vunpack.c.l.b16 %v391
        %v428 = vunpack.c.l.b16 %v392
        %v429 = vunpack.c.l.b16 %v393
        %v430 = vunpack.c.l.b16 %v394
        %v431 = vpack.c.b16 %v428, %v427
        %v432 = vpack.c.b16 %v430, %v429
        %vm433 = vcmask 261120
        %v435 = vsel %vm433, %v431, 0
        %v438 = vsel %vm433, %v432, 0
        %440 = vmatprep.subr.bf16.mxu0 %v396
        %441 = vmatpush1.bf16.msra.mxu0 %v395
        %442 = vmatprep.subr.bf16.mxu0 %v398
        %443 = vmatpush1.bf16.msra.mxu0 %v397
        %444 = vmatprep.subr.bf16.mxu0 0
        %445 = vmatpush1.bf16.msra.mxu0 0
        %446 = vmatprep.subr.bf16.mxu0 0
        %447 = vmatpush1.bf16.msra.mxu0 0
        %448 = vmatprep.subr.bf16.mxu0 0
        %449 = vmatpush1.bf16.msra.mxu0 0
        %450 = vmatprep.subr.bf16.mxu0 0
        %451 = vmatpush1.bf16.msra.mxu0 0
        %452 = vmatprep.subr.bf16.mxu0 0
        %453 = vmatpush1.bf16.msra.mxu0 0
        %454 = vmatprep.subr.bf16.mxu0 0
        %455 = vmatpush1.bf16.msra.mxu0 0
        %456 = vmatprep.subr.bf16.mxu0 0
        %457 = vmatpush1.bf16.msra.mxu0 0
        %458 = vmatprep.subr.bf16.mxu0 0
        %459 = vmatpush1.bf16.msra.mxu0 0
        %460 = vmatprep.subr.bf16.mxu0 0
        %461 = vmatpush1.bf16.msra.mxu0 0
        %462 = vmatprep.subr.bf16.mxu0 0
        %463 = vmatpush1.bf16.msra.mxu0 0
        %464 = vmatprep.subr.bf16.mxu0 0
        %465 = vmatpush1.bf16.msra.mxu0 0
        %466 = vmatprep.subr.bf16.mxu0 0
        %467 = vmatpush1.bf16.msra.mxu0 0
        %468 = vmatprep.subr.bf16.mxu0 0
        %469 = vmatpush1.bf16.msra.mxu0 0
        %470 = vmatprep.subr.bf16.mxu0 0
        %471 = vmatpush1.bf16.msra.mxu0 0
        %472 = vmatprep.mubr.bf16.mxu0 0
        %473 = vmatmul.mubr.bf16.gmra.mrb[0].mxu0 %v435
        %v474 = vpop.f32.mrb[0].mxu0
        %v475 = vadd.f32 %v406, %v474
        %v476 = vpop.f32.mrb[0].mxu0
        %v477 = vadd.f32 %v406, %v476
        %v478 = vpop.f32.mrb[0].mxu0
        %v479 = vadd.f32 %v411, %v478
        %v480 = vpop.f32.mrb[0].mxu0
        %v481 = vadd.f32 %v411, %v480
        %482 = vmatprep.mubr.bf16.mxu0 0
        %483 = vmatmul.mubr.bf16.gmra.mrb[0].mxu0 %v438
        %v484 = vpop.f32.mrb[0].mxu0
        %v485 = vadd.f32 %v416, %v484
        %v486 = vpop.f32.mrb[0].mxu0
        %v487 = vadd.f32 %v416, %v486
        %v488 = vpop.f32.mrb[0].mxu0
        %v489 = vadd.f32 %v421, %v488
        %v490 = vpop.f32.mrb[0].mxu0
        %v491 = vadd.f32 %v421, %v490
        %492 = vdwg.mxu0
        %v493 = vxor.u32 %v475, 2147483648
        %v494 = vxor.u32 %v477, 2147483648
        %v495 = vxor.u32 %v479, 2147483648
        %v496 = vxor.u32 %v481, 2147483648
        %v497 = vxor.u32 %v485, 2147483648
        %v498 = vxor.u32 %v487, 2147483648
        %v499 = vxor.u32 %v489, 2147483648
        %v500 = vxor.u32 %v491, 2147483648
        %v501 = vmul.f32 %v493, 1.442695
        %v502 = vpow.pop %v501
        %v503 = vmul.f32 %v494, 1.442695
        %v504 = vpow.pop %v503
        %v505 = vmul.f32 %v495, 1.442695
        %v506 = vpow.pop %v505
        %v507 = vmul.f32 %v496, 1.442695
        %v508 = vpow.pop %v507
        %v509 = vmul.f32 %v497, 1.442695
        %v510 = vpow.pop %v509
        %v511 = vmul.f32 %v498, 1.442695
        %v512 = vpow.pop %v511
        %v513 = vmul.f32 %v499, 1.442695
        %v514 = vpow.pop %v513
        %v515 = vmul.f32 %v500, 1.442695
        %v516 = vpow.pop %v515
        %v517 = vadd.f32 %v502, 1.0
        %v518 = vadd.f32 %v504, 1.0
        %v519 = vadd.f32 %v506, 1.0
        %v520 = vadd.f32 %v508, 1.0
        %v521 = vadd.f32 %v510, 1.0
        %v522 = vadd.f32 %v512, 1.0
        %v523 = vadd.f32 %v514, 1.0
        %v524 = vadd.f32 %v516, 1.0
        %v525 = vrcp.pop %v517
        %v526 = vmul.f32 1.0, %v525
        %v527 = vrcp.pop %v518
        %v528 = vmul.f32 1.0, %v527
        %v529 = vrcp.pop %v519
        %v530 = vmul.f32 1.0, %v529
        %v531 = vrcp.pop %v520
        %v532 = vmul.f32 1.0, %v531
        %v533 = vrcp.pop %v521
        %v534 = vmul.f32 1.0, %v533
        %v535 = vrcp.pop %v522
        %v536 = vmul.f32 1.0, %v535
        %v537 = vrcp.pop %v523
        %v538 = vmul.f32 1.0, %v537
        %v539 = vrcp.pop %v524
        %v540 = vmul.f32 1.0, %v539
        %541 = vst [vmem:[%s261] sm:$0xff] %v526
        %542 = vst [vmem:[%s261 + $0x8] sm:$0xff] %v528
        %543 = vst [vmem:[%s261 + $0x10] sm:$0xff] %v530
        %544 = vst [vmem:[%s261 + $0x18] sm:$0xff] %v532
        %545 = vst [vmem:[%s261 + $0x20] sm:$0xff] %v534
        %546 = vst [vmem:[%s261 + $0x28] sm:$0xff] %v536
        %547 = vst [vmem:[%s261 + $0x30] sm:$0xff] %v538
        %548 = vst [vmem:[%s261 + $0x38] sm:$0xff] %v540
        %s549 = sand.u32 %s137, 1
        %s550 = scalar_lea.sflag [#allocation4], %s549
        %s551 = sand.u32 %s137, 1
        %s552 = smul.addr %s551, 64
        %s553 = scalar_lea.vmem [#allocation3], %s552
        // Predicated region
        $region79: #{tpu_custom_call.1} parent=73 // pred_check
          %p554 = pneg %p147
        $region80: #{tpu_custom_call.1} parent=73 // pred_check_branch
          %556 = sbr.rel (%p554) target = $region82
        $region81: #{tpu_custom_call.1} parent=73 // pred_region
          %s557 = smul.u32 2, %s19
          %s559 = ssub.s32 1024, 1024
          %560 = vsyncadd %s550, %s559
          %s561 = smul.addr %s557, 128
          %s562 = scalar_lea.hbm %s5, %s561
          %s563 = sshll.u32 %s553, 4
          %s564 = int_to_ptr.vmem [resolvable:$true] %s563
          %569 = dma.vmem_to_hbm [thread:$0]  %s564, 1024, %s562, %s550, 256, 512, 16
        $region82: #{tpu_custom_call.1} parent=73 // pred_fallthru
          _
      $region74: #{tpu_custom_call.1} parent=5 // pred_fallthru
        _
      %p570 = scmp.le.s32.totalorder 2, %s14
      // Predicated region
      $region83: #{tpu_custom_call.1} parent=5 // pred_check
        %p571 = pneg %p570
      $region84: #{tpu_custom_call.1} parent=5 // pred_check_branch
        %573 = sbr.rel (%p571) target = $region86
      $region85: #{tpu_custom_call.1} parent=5 // pred_region
        %s574 = ssub.s32 %s14, 2
        // Predicated region
        $region87: #{tpu_custom_call.1} parent=85 // pred_check
          %p575 = pneg %p153
        $region88: #{tpu_custom_call.1} parent=85 // pred_check_branch
          %577 = sbr.rel (%p575) target = $region90
        $region89: #{tpu_custom_call.1} parent=85 // pred_region
          %s578 = sand.u32 %s138, 1
          %s579 = scalar_lea.sflag [#allocation4], %s578
          %s580 = sand.u32 %s138, 1
          %s581 = smul.addr %s580, 64
          %s582 = scalar_lea.vmem [#allocation3], %s581
          %583 = dma.done %s579, 1024
        $region90: #{tpu_custom_call.1} parent=85 // pred_fallthru
          _
      $region86: #{tpu_custom_call.1} parent=5 // pred_fallthru
        _
    $region6: #{tpu_custom_call.1} parent=1 // loop_footer
      %s18 = sadd.s32 1, %s14
    $region7: #{tpu_custom_call.1} parent=1 // loop_footer_branch
      %13 = sbr.rel target = $region3
    $region8: #{tpu_custom_call.1} parent=1 // loop_exit
      _
    %584 = vsyncpa [#allocation4], 1
    %s585 = scalar_lea.sflag [#allocation4], 1
    %586 = vsyncpa %s585, 1

</llo_original>
